<compile_context>
chip_gen: v5e
topology: v5e:2x2
jax: 0.10.0
libtpu: 0.0.40
codegen_flags: <defaults>
</compile_context>

<pallas_src>
import functools
import math

import jax
import jax.numpy as jnp
from jax.experimental import pallas as pl
from jax.experimental.pallas import tpu as pltpu

_LANE_CANDIDATES = (1024, 512, 256, 128)   # widest lane-dense slab that divides total
_MAX_BLOCK_ROWS = 1024                     # 4 MiB/buffer at lane=1024 f32


def _heatmap_loss_kernel(inp_ref, tgt_ref, out_ref, *, alpha, beta):
    # Upcast in-register only; HBM traffic stays in the native (possibly bf16) dtype.
    x = inp_ref[...].astype(jnp.float32)
    t = tgt_ref[...].astype(jnp.float32)

    eps = jnp.float32(1e-14)
    is_center = t == 1.0
    one_minus_x = 1.0 - x

    # Fused form of the reference (a single log per element):
    #   center: -(1 - x)^alpha          * log(x + eps)
    #   other : -(1 - t)^beta * x^alpha * log(1 - x + eps)
    log_arg = jnp.where(is_center, x, one_minus_x) + eps
    if alpha % 2 == 0 and beta % 2 == 0:
        # Select on the half-power weight, square after the select: saves VALU
        # multiplies and a live vreg per chunk (alpha/beta are static ints).
        w = jnp.where(is_center, one_minus_x ** (alpha // 2),
                      (1.0 - t) ** (beta // 2) * (x ** (alpha // 2)))
        weight = w * w
    else:
        weight = jnp.where(is_center, one_minus_x ** alpha,
                           (1.0 - t) ** beta * (x ** alpha))

    out_ref[...] = (-weight * jnp.log(log_arg)).astype(out_ref.dtype)


def heatmap_loss(inputs, targets, alpha=2, beta=4):
    """Elementwise focal heatmap loss; same shape (and dtype promotion) as the inputs."""
    assert inputs.shape == targets.shape
    orig_shape = inputs.shape
    total = int(math.prod(orig_shape)) if orig_shape else 1
    out_dtype = jnp.result_type(inputs.dtype, targets.dtype)

    if total == 0:
        return jnp.zeros(orig_shape, out_dtype)

    # ---- lane-dense slab without extra HBM copies ---------------------------
    lane = next((l for l in _LANE_CANDIDATES if total % l == 0), None)
    needs_slice = False
    if lane is not None:
        rows = total // lane
        x2 = inputs.reshape(rows, lane)          # contiguous -> free reshape
        t2 = targets.reshape(rows, lane)
    else:
        # Rare ragged case (total not a multiple of 128): minimal pad + slice.
        lane = 128
        rows = -(-total // lane)
        pad = rows * lane - total
        x2 = jnp.concatenate(
            [inputs.reshape(-1), jnp.full((pad,), 0.5, inputs.dtype)]).reshape(rows, lane)
        t2 = jnp.concatenate(
            [targets.reshape(-1), jnp.zeros((pad,), targets.dtype)]).reshape(rows, lane)
        needs_slice = True

    # ---- block tiling --------------------------------------------------------
    # Sublane alignment for the narrowest dtype flowing through the kernel
    # (8 rows for f32, 16 for bf16, 32 for 8-bit).
    min_itemsize = min(jnp.dtype(inputs.dtype).itemsize,
                       jnp.dtype(targets.dtype).itemsize,
                       jnp.dtype(out_dtype).itemsize)
    sublane = 8 * max(1, 4 // max(1, min_itemsize))

    if rows < 2 * sublane:
        block_rows = rows                        # single block == full array extent
    else:
        # >= 2 grid steps so "parallel" can split work across v7x's two
        # TensorCores; cap block size to keep the double-buffered footprint
        # well inside v7x's 64 MiB per-TC VMEM.
        half = -(-rows // 2)
        half = -(-half // sublane) * sublane
        block_rows = min(_MAX_BLOCK_ROWS, half)
    grid = (pl.cdiv(rows, block_rows),)          # partial last block masked by Pallas

    block_spec = pl.BlockSpec((block_rows, lane), lambda i: (i, 0))

    in_bytes = (jnp.dtype(inputs.dtype).itemsize
                + jnp.dtype(targets.dtype).itemsize)
    out_bytes = jnp.dtype(out_dtype).itemsize
    vmem_need = 2 * block_rows * lane * (in_bytes + out_bytes)   # double-buffered
    vmem_limit = int(min(max(vmem_need + (8 << 20), 24 << 20), 48 << 20))

    kernel = functools.partial(_heatmap_loss_kernel, alpha=alpha, beta=beta)

    out = pl.pallas_call(
        kernel,
        out_shape=jax.ShapeDtypeStruct((rows, lane), out_dtype),
        grid_spec=pl.GridSpec(
            grid=grid,
            in_specs=[block_spec, block_spec],
            out_specs=block_spec,
        ),
        compiler_params=pltpu.CompilerParams(
            dimension_semantics=("parallel",),
            vmem_limit_bytes=vmem_limit,
        ),
        cost_estimate=pl.CostEstimate(
            flops=10 * total,
            transcendentals=total,                      # one log per element
            bytes_accessed=total * (in_bytes + out_bytes),
        ),
    )(x2, t2)

    if needs_slice:
        return out.reshape(-1)[:total].reshape(orig_shape)
    return out.reshape(orig_shape)


def heatmap_loss_ref(inputs, targets, alpha=2, beta=4):
    """Pure-JAX reference matching the PyTorch forward exactly (computed in f32)."""
    x = inputs.astype(jnp.float32)
    t = targets.astype(jnp.float32)
    center_id = (t == 1.0).astype(jnp.float32)
    other_id = (t != 1.0).astype(jnp.float32)
    center_loss = -center_id * (1.0 - x) ** alpha * jnp.log(x + 1e-14)
    other_loss = (-other_id * (1.0 - t) ** beta * x ** alpha
                  * jnp.log(1.0 - x + 1e-14))
    return center_loss + other_loss


def _make_inputs(key, shape, dtype=jnp.float32):
    k1, k2, k3 = jax.random.split(key, 3)
    inp = jax.nn.sigmoid(jax.random.normal(k1, shape, dtype=jnp.float32))
    tgt = jax.random.uniform(k2, shape, dtype=jnp.float32, maxval=0.99)
    peaks = jax.random.uniform(k3, shape) > 0.97
    tgt = jnp.where(peaks, jnp.float32(1.0), tgt)
    return inp.astype(dtype), tgt.astype(dtype)


if __name__ == "__main__":
    key = jax.random.PRNGKey(0)
    k_main, k_ragged, k_multi, k_bf16 = jax.random.split(key, 4)

    # Main case: NCHW (2, 4, 16, 16), f32 — no-pad lane-dense path, single block.
    inputs, targets = _make_inputs(k_main, (2, 4, 16, 16))
    out = jax.block_until_ready(heatmap_loss(inputs, targets))
    ref = heatmap_loss_ref(inputs, targets)
    assert out.shape == inputs.shape and out.dtype == inputs.dtype
    assert jnp.allclose(out, ref, atol=1e-5, rtol=1e-5), "mismatch vs reference (main)"

    # Ragged case: total not a multiple of 128 — exercises the padded fallback.
    inputs_r, targets_r = _make_inputs(k_ragged, (3, 5, 7, 11))
    out_r = jax.block_until_ready(heatmap_loss(inputs_r, targets_r))
    ref_r = heatmap_loss_ref(inputs_r, targets_r)
    assert jnp.allclose(out_r, ref_r, atol=1e-5, rtol=1e-5), "mismatch vs reference (ragged)"

    # Multi-block case: exercises the >=2-step grid (v7x megacore split).
    inputs_m, targets_m = _make_inputs(k_multi, (4, 8, 32, 32))
    out_m = jax.block_until_ready(heatmap_loss(inputs_m, targets_m))
    ref_m = heatmap_loss_ref(inputs_m, targets_m)
    assert jnp.allclose(out_m, ref_m, atol=1e-5, rtol=1e-5), "mismatch vs reference (multi)"

    # bf16 case: native-dtype HBM path, f32 math in-register.
    inputs_b, targets_b = _make_inputs(k_bf16, (2, 4, 16, 16), dtype=jnp.bfloat16)
    out_b = jax.block_until_ready(heatmap_loss(inputs_b, targets_b))
    ref_b = heatmap_loss_ref(inputs_b, targets_b).astype(jnp.bfloat16)
    assert out_b.dtype == jnp.bfloat16
    assert jnp.allclose(out_b.astype(jnp.float32), ref_b.astype(jnp.float32),
                        atol=5e-2, rtol=5e-2), "mismatch vs reference (bf16)"

    print("KERNEL_OK")
</pallas_src>

<mosaic_0001>
module attributes {stable_mosaic.version = 11 : i64} {
  func.func @_heatmap_loss_kernel(%arg0: i32, %arg1: memref<2x1024xf32, #tpu.memory_space<vmem>>, %arg2: memref<2x1024xf32, #tpu.memory_space<vmem>>, %arg3: memref<2x1024xf32, #tpu.memory_space<vmem>>) attributes {dimension_semantics = [#tpu.dimension_semantics<parallel>], iteration_bounds = array<i64: 1>, scalar_prefetch = 0 : i64, scratch_operands = 0 : i64, tpu.core_type = #tpu.core_type<tc>, window_params = [{transform_indices = @transform_0, window_bounds = array<i64: 2, 1024>}, {transform_indices = @transform_1, window_bounds = array<i64: 2, 1024>}, {transform_indices = @transform_2, window_bounds = array<i64: 2, 1024>}]} {
    %c0 = arith.constant 0 : index
    %c0_0 = arith.constant 0 : index
    %0 = vector.load %arg1[%c0, %c0_0] : memref<2x1024xf32, #tpu.memory_space<vmem>>, vector<2x1024xf32>
    %c0_1 = arith.constant 0 : index
    %c0_2 = arith.constant 0 : index
    %1 = vector.load %arg2[%c0_1, %c0_2] : memref<2x1024xf32, #tpu.memory_space<vmem>>, vector<2x1024xf32>
    %cst = arith.constant 1.000000e+00 : f32
    %2 = vector.broadcast %cst : f32 to vector<2x1024xf32>
    %3 = arith.cmpf oeq, %1, %2 : vector<2x1024xf32>
    %cst_3 = arith.constant 1.000000e+00 : f32
    %4 = vector.broadcast %cst_3 : f32 to vector<2x1024xf32>
    %5 = arith.subf %4, %0 : vector<2x1024xf32>
    %6 = arith.select %3, %0, %5 : vector<2x1024xi1>, vector<2x1024xf32>
    %cst_4 = arith.constant 9.99999982E-15 : f32
    %7 = vector.broadcast %cst_4 : f32 to vector<2x1024xf32>
    %8 = arith.addf %6, %7 : vector<2x1024xf32>
    %cst_5 = arith.constant 1.000000e+00 : f32
    %9 = vector.broadcast %cst_5 : f32 to vector<2x1024xf32>
    %10 = arith.subf %9, %1 : vector<2x1024xf32>
    %11 = arith.mulf %10, %10 : vector<2x1024xf32>
    %12 = arith.mulf %11, %0 : vector<2x1024xf32>
    %13 = arith.select %3, %5, %12 : vector<2x1024xi1>, vector<2x1024xf32>
    %14 = arith.mulf %13, %13 : vector<2x1024xf32>
    %cst_6 = arith.constant 0.000000e+00 : f32
    %15 = vector.broadcast %cst_6 : f32 to vector<2x1024xf32>
    %16 = arith.subf %15, %14 : vector<2x1024xf32>
    %17 = math.log %8 : vector<2x1024xf32>
    %18 = arith.mulf %16, %17 : vector<2x1024xf32>
    %c0_7 = arith.constant 0 : index
    %c0_8 = arith.constant 0 : index
    %19 = vector.load %arg3[%c0_7, %c0_8] : memref<2x1024xf32, #tpu.memory_space<vmem>>, vector<2x1024xf32>
    tpu.vector_store %arg3[%c0_7, %c0_8], %18 {strides = array<i32>} : memref<2x1024xf32, #tpu.memory_space<vmem>>, vector<2x1024xf32>,
    return
  }
  func.func @transform_0(%arg0: i32) -> (i32, i32) {
    %c0_i32 = arith.constant 0 : i32
    %c0_i32_0 = arith.constant 0 : i32
    return %arg0, %c0_i32 : i32, i32
  }
  func.func @transform_1(%arg0: i32) -> (i32, i32) {
    %c0_i32 = arith.constant 0 : i32
    %c0_i32_0 = arith.constant 0 : i32
    return %arg0, %c0_i32 : i32, i32
  }
  func.func @transform_2(%arg0: i32) -> (i32, i32) {
    %c0_i32 = arith.constant 0 : i32
    %c0_i32_0 = arith.constant 0 : i32
    return %arg0, %c0_i32 : i32, i32
  }
}

</mosaic_0001>

<llo_original>
// kernel: tpu_custom_call.1
$region0: #{tpu_custom_call.1}
  #allocation0 [shape = 'u32[]', space=smem, size = 0x4, offset = 0x4, fixed_abs, tag = 'smem constant byte address 0x4 - core index']
  #allocation1 [shape = 'u32[72,128]{1,0:T(1,128)}', space=vmem, size = 0x9000, scoped, tag = 'internal scratch']
  %s0 = inlined_call_operand.hbm [shape: f32[2,1024], index: 0, kind: input, shape index: {}]
  %s1 = inlined_call_operand.hbm [shape: f32[2,1024], index: 1, kind: input, shape index: {}]
  %s2 = inlined_call_operand.hbm [shape: f32[2,1024], index: 2, kind: output, shape index: {}]
  %s3 = sld [smem:[#allocation0]]
  $region26: #{tpu_custom_call.1} parent=0
    _
  %s5 = ssub.s32 1, %s3
  %s6 = scalar_select 0, %s5, %s3
  $region1: #{tpu_custom_call.1} parent=0
    #allocation2 [shape = 'u8[8192]{0}', space=vmem, size = 0x2000, scoped, tag = 'input window, operand 0, single buffered']
    #allocation3 [shape = 's32[1]{0}', space=sflag, size = 0x4, scoped, tag = 'scoped memory for tpu_custom_call.1']
    #allocation4 [shape = 's32[1]{0}', space=sflag, size = 0x4, scoped, tag = 'scoped memory for tpu_custom_call.1']
    #allocation5 [shape = 'u8[8192]{0}', space=vmem, size = 0x2000, scoped, tag = 'input window, operand 1, single buffered']
    #allocation6 [shape = 's32[1]{0}', space=sflag, size = 0x4, scoped, tag = 'scoped memory for tpu_custom_call.1']
    #allocation7 [shape = 'u8[8192]{0}', space=vmem, size = 0x2000, scoped, tag = 'output window, operand 0, single buffered']
    %7 = vsyncpa [#allocation3], 0
    %8 = vsyncpa [#allocation6], 0
    %9 = vsyncpa [#allocation4], 0
    // Predicated region
    $region2: #{tpu_custom_call.1} parent=1 // pred_check
      _
    $region3: #{tpu_custom_call.1} parent=1 // pred_check_branch
      %11 = sbr.rel (0) target = $region5
    $region4: #{tpu_custom_call.1} parent=1 // pred_region
      %13 = vsyncadd [#allocation3], 0
      %s15 = sshll.u32 %s0, 4
      %s16 = int_to_ptr.hbm [resolvable:$true] %s15
      %s17 = sshll.u32 [#allocation2], 4
      %s18 = int_to_ptr.vmem [resolvable:$true] %s17
      %20 = dma.hbm_to_vmem [thread:$0]  %s16, 256, %s18, [#allocation3]
    $region5: #{tpu_custom_call.1} parent=1 // pred_fallthru
      _
    // Predicated region
    $region6: #{tpu_custom_call.1} parent=1 // pred_check
      _
    $region7: #{tpu_custom_call.1} parent=1 // pred_check_branch
      %22 = sbr.rel (0) target = $region9
    $region8: #{tpu_custom_call.1} parent=1 // pred_region
      %24 = vsyncadd [#allocation6], 0
      %s26 = sshll.u32 %s1, 4
      %s27 = int_to_ptr.hbm [resolvable:$true] %s26
      %s28 = sshll.u32 [#allocation5], 4
      %s29 = int_to_ptr.vmem [resolvable:$true] %s28
      %31 = dma.hbm_to_vmem [thread:$0]  %s27, 256, %s29, [#allocation6]
    $region9: #{tpu_custom_call.1} parent=1 // pred_fallthru
      _
    // Predicated region
    $region10: #{tpu_custom_call.1} parent=1 // pred_check
      _
    $region11: #{tpu_custom_call.1} parent=1 // pred_check_branch
      %33 = sbr.rel (0) target = $region13
    $region12: #{tpu_custom_call.1} parent=1 // pred_region
      %35 = dma.done [#allocation3], 256
    $region13: #{tpu_custom_call.1} parent=1 // pred_fallthru
      _
    // Predicated region
    $region14: #{tpu_custom_call.1} parent=1 // pred_check
      _
    $region15: #{tpu_custom_call.1} parent=1 // pred_check_branch
      %37 = sbr.rel (0) target = $region17
    $region16: #{tpu_custom_call.1} parent=1 // pred_region
      %39 = dma.done [#allocation6], 256
    $region17: #{tpu_custom_call.1} parent=1 // pred_fallthru
      _
    %v40 = vld [vmem:[#allocation2] sm:$0xff]
    %v41 = vld [vmem:[#allocation2 + $0x8] sm:$0xff]
    %v42 = vld [vmem:[#allocation5] sm:$0xff]
    %v43 = vld [vmem:[#allocation5 + $0x8] sm:$0xff]
    %vm44 = vcmp.eq.f32.partialorder %v42, 1.0
    %vm45 = vcmp.eq.f32.partialorder %v43, 1.0
    %v46 = vsub.f32 1.0, %v40
    %v47 = vsub.f32 1.0, %v41
    %v48 = vsel %vm44, %v40, %v46
    %v49 = vsel %vm45, %v41, %v47
    %v50 = vadd.f32 %v48, 1e-14
    %v51 = vadd.f32 %v49, 1e-14
    %v52 = vsub.f32 1.0, %v42
    %v53 = vsub.f32 1.0, %v43
    %v54 = vmul.f32 %v52, %v52
    %v55 = vmul.f32 %v53, %v53
    %v56 = vmul.f32 %v54, %v40
    %v57 = vmul.f32 %v55, %v41
    %v58 = vsel %vm44, %v46, %v56
    %v59 = vsel %vm45, %v47, %v57
    %v60 = vmul.f32 %v58, %v58
    %v61 = vmul.f32 %v59, %v59
    %v62 = vsub.f32 0.0, %v60
    %v63 = vsub.f32 0.0, %v61
    %v64 = vlog2.pop %v50
    %v65 = vmul.f32 %v64, 0.6931472
    %v66 = vlog2.pop %v51
    %v67 = vmul.f32 %v66, 0.6931472
    %v68 = vmul.f32 %v62, %v65
    %v69 = vmul.f32 %v63, %v67
    %70 = vst [vmem:[#allocation7] sm:$0xff] %v68
    %71 = vst [vmem:[#allocation7 + $0x8] sm:$0xff] %v69
    // Predicated region
    $region18: #{tpu_custom_call.1} parent=1 // pred_check
      _
    $region19: #{tpu_custom_call.1} parent=1 // pred_check_branch
      %73 = sbr.rel (0) target = $region21
    $region20: #{tpu_custom_call.1} parent=1 // pred_region
      %75 = vsyncadd [#allocation4], 0
      %s77 = sshll.u32 [#allocation7], 4
      %s78 = int_to_ptr.vmem [resolvable:$true] %s77
      %s79 = sshll.u32 %s2, 4
      %s80 = int_to_ptr.hbm [resolvable:$true] %s79
      %82 = dma.vmem_to_hbm [thread:$0]  %s78, 256, %s80, [#allocation4]
    $region21: #{tpu_custom_call.1} parent=1 // pred_fallthru
      _
    // Predicated region
    $region22: #{tpu_custom_call.1} parent=1 // pred_check
      _
    $region23: #{tpu_custom_call.1} parent=1 // pred_check_branch
      %84 = sbr.rel (0) target = $region25
    $region24: #{tpu_custom_call.1} parent=1 // pred_region
      %86 = dma.done [#allocation4], 256
    $region25: #{tpu_custom_call.1} parent=1 // pred_fallthru
      _
    %87 = vsyncpa [#allocation3], 1
    %88 = vsyncpa [#allocation6], 1
    %89 = vsyncpa [#allocation4], 1

</llo_original>
